<compile_context>
chip_gen: v5e
topology: v5e:2x2
jax: 0.10.0
libtpu: 0.0.40
codegen_flags: <defaults>
</compile_context>

<pallas_src>
import jax
import jax.numpy as jnp
from jax.experimental import pallas as pl
from jax.experimental.pallas import tpu as pltpu

_LANE = 512          # slab width: multiple of 128 -> full-lane, unmasked loads/stores
_MAX_TILE_ROWS = 512 # 512x512 f32 = 1 MiB per input tile


def _round_up(x: int, m: int) -> int:
    return ((x + m - 1) // m) * m


def _wdl_fused_kernel(real_ref, fake_ref, out_ref):
    """Equal-count path: accumulate sum(real_tile - fake_tile) into out block."""
    @pl.when(pl.program_id(1) == 0)
    def _():
        out_ref[...] = jnp.zeros_like(out_ref)

    d = real_ref[...].astype(jnp.float32) - fake_ref[...].astype(jnp.float32)
    # (tile_rows, LANE) -> (tile_rows//8, 8, LANE); sum over the leading axis is
    # pure element-wise vreg adds (VPU).  No per-step cross-lane reduce.
    out_ref[...] += jnp.sum(d.reshape(-1, 8, _LANE), axis=0)


def _wdl_split_kernel(real_ref, fake_ref, out_r_ref, out_f_ref):
    """General path (different element counts): separate running sums."""
    @pl.when(pl.program_id(1) == 0)
    def _():
        out_r_ref[...] = jnp.zeros_like(out_r_ref)
        out_f_ref[...] = jnp.zeros_like(out_f_ref)

    r = real_ref[...].astype(jnp.float32)
    f = fake_ref[...].astype(jnp.float32)
    out_r_ref[...] += jnp.sum(r.reshape(-1, 8, _LANE), axis=0)
    out_f_ref[...] += jnp.sum(f.reshape(-1, 8, _LANE), axis=0)


def _to_slab(x: jax.Array, rows: int) -> jax.Array:
    """Flatten to a lane-dense (rows, _LANE) slab, zero-padded (zeros don't change sums)."""
    flat = jnp.ravel(x)
    pad = rows * _LANE - flat.shape[0]
    if pad:
        flat = jnp.pad(flat, (0, pad))
    return flat.reshape(rows, _LANE)


def wasserstein_discriminator_loss(real_out: jax.Array, fake_out: jax.Array) -> jax.Array:
    """mean(real_out) - mean(fake_out), reduction done in a tiled Pallas TPU kernel."""
    n_real = int(real_out.size)
    n_fake = int(fake_out.size)

    # --- tiling (all static Python ints) ------------------------------------
    rows0 = max(pl.cdiv(n_real, _LANE), pl.cdiv(n_fake, _LANE))
    rows0 = _round_up(max(rows0, 8), 8)              # (8,128) sublane constraint
    tile_rows = min(_MAX_TILE_ROWS, rows0)           # both multiples of 8
    num_tiles = pl.cdiv(rows0, tile_rows)
    num_p = 2 if num_tiles >= 2 else 1               # feed both v7x TensorCores
    num_k = pl.cdiv(num_tiles, num_p)
    rows = num_p * num_k * tile_rows                 # padded total rows

    real2d = _to_slab(real_out, rows)
    fake2d = _to_slab(fake_out, rows)

    in_spec = pl.BlockSpec((tile_rows, _LANE), lambda p, k: (p * num_k + k, 0))
    # Output accumulator: one (8, _LANE) f32 block per parallel partial; block
    # index is constant in k, so it stays resident in VMEM across the k loop.
    out_spec = pl.BlockSpec((8, _LANE), lambda p, k: (p, 0))
    out_sds = jax.ShapeDtypeStruct((8 * num_p, _LANE), jnp.float32)

    cost = pl.CostEstimate(
        flops=2 * (n_real + n_fake),
        transcendentals=0,
        bytes_accessed=(real2d.size * real2d.dtype.itemsize
                        + fake2d.size * fake2d.dtype.itemsize
                        + 2 * 8 * num_p * _LANE * 4),
    )
    params = pltpu.CompilerParams(
        dimension_semantics=("parallel", "arbitrary"))

    if n_real == n_fake:
        partial = pl.pallas_call(
            _wdl_fused_kernel,
            out_shape=out_sds,
            grid=(num_p, num_k),
            in_specs=[in_spec, in_spec],
            out_specs=out_spec,
            compiler_params=params,
            cost_estimate=cost,
        )(real2d, fake2d)
        # Tiny final reduce + divide stays in XLA (fuses with surrounding graph).
        return jnp.sum(partial) / n_real

    partial_r, partial_f = pl.pallas_call(
        _wdl_split_kernel,
        out_shape=(out_sds, out_sds),
        grid=(num_p, num_k),
        in_specs=[in_spec, in_spec],
        out_specs=(out_spec, out_spec),
        compiler_params=params,
        cost_estimate=cost,
    )(real2d, fake2d)
    return jnp.sum(partial_r) / n_real - jnp.sum(partial_f) / n_fake


if __name__ == "__main__":
    key = jax.random.PRNGKey(0)
    k1, k2, k3, k4 = jax.random.split(key, 4)

    # Small WGAN-critic-style outputs: NCHW (2, 4, 16, 16).
    real = jax.random.normal(k1, (2, 4, 16, 16), dtype=jnp.float32)
    fake = jax.random.normal(k2, (2, 4, 16, 16), dtype=jnp.float32)

    loss = wasserstein_discriminator_loss(real, fake)
    jax.block_until_ready(loss)
    ref = jnp.mean(real) - jnp.mean(fake)
    assert jnp.allclose(loss, ref, atol=1e-5, rtol=1e-4), (loss, ref)

    # Larger case: exercises the tiled (K>1) + dual-partial (P=2) pipeline.
    real_big = jax.random.normal(k3, (16, 4, 128, 128), dtype=jnp.float32)
    fake_big = jax.random.normal(k4, (16, 4, 128, 128), dtype=jnp.float32)
    loss_big = wasserstein_discriminator_loss(real_big, fake_big)
    jax.block_until_ready(loss_big)
    ref_big = jnp.mean(real_big) - jnp.mean(fake_big)
    assert jnp.allclose(loss_big, ref_big, atol=1e-5, rtol=1e-4), (loss_big, ref_big)

    # Unequal element counts: exercises the two-accumulator fallback kernel.
    real_u = jax.random.normal(k1, (3, 4, 16, 16), dtype=jnp.float32)
    loss_u = wasserstein_discriminator_loss(real_u, fake)
    jax.block_until_ready(loss_u)
    ref_u = jnp.mean(real_u) - jnp.mean(fake)
    assert jnp.allclose(loss_u, ref_u, atol=1e-5, rtol=1e-4), (loss_u, ref_u)

    print("KERNEL_OK")
</pallas_src>

<mosaic_0001>
module attributes {stable_mosaic.version = 11 : i64} {
  func.func @_wdl_fused_kernel(%arg0: i32, %arg1: i32, %arg2: memref<8x512xf32, #tpu.memory_space<vmem>>, %arg3: memref<8x512xf32, #tpu.memory_space<vmem>>, %arg4: memref<8x512xf32, #tpu.memory_space<vmem>>) attributes {dimension_semantics = [#tpu.dimension_semantics<parallel>, #tpu.dimension_semantics<arbitrary>], iteration_bounds = array<i64: 1, 1>, scalar_prefetch = 0 : i64, scratch_operands = 0 : i64, tpu.core_type = #tpu.core_type<tc>, window_params = [{transform_indices = @transform_0, window_bounds = array<i64: 8, 512>}, {transform_indices = @transform_1, window_bounds = array<i64: 8, 512>}, {transform_indices = @transform_2, window_bounds = array<i64: 8, 512>}]} {
    %c0_i32 = arith.constant 0 : i32
    %0 = arith.cmpi eq, %arg1, %c0_i32 : i32
    %1 = arith.extui %0 : i1 to i32
    %c0_i32_0 = arith.constant 0 : i32
    %2 = arith.cmpi ne, %1, %c0_i32_0 : i32
    scf.if %2 {
      %cst_8 = arith.constant 0.000000e+00 : f32
      %11 = vector.broadcast %cst_8 : f32 to vector<8x512xf32>
      %c0_9 = arith.constant 0 : index
      %c0_10 = arith.constant 0 : index
      %12 = vector.load %arg4[%c0_9, %c0_10] : memref<8x512xf32, #tpu.memory_space<vmem>>, vector<8x512xf32>
      tpu.vector_store %arg4[%c0_9, %c0_10], %11 {strides = array<i32>} : memref<8x512xf32, #tpu.memory_space<vmem>>, vector<8x512xf32>,
    } else {
    }
    %c0 = arith.constant 0 : index
    %c0_1 = arith.constant 0 : index
    %3 = vector.load %arg2[%c0, %c0_1] : memref<8x512xf32, #tpu.memory_space<vmem>>, vector<8x512xf32>
    %c0_2 = arith.constant 0 : index
    %c0_3 = arith.constant 0 : index
    %4 = vector.load %arg3[%c0_2, %c0_3] : memref<8x512xf32, #tpu.memory_space<vmem>>, vector<8x512xf32>
    %5 = arith.subf %3, %4 : vector<8x512xf32>
    %c0_4 = arith.constant 0 : index
    %c0_5 = arith.constant 0 : index
    %6 = vector.load %arg4[%c0_4, %c0_5] : memref<8x512xf32, #tpu.memory_space<vmem>>, vector<8x512xf32>
    %7 = vector.shape_cast %5 : vector<8x512xf32> to vector<1x8x512xf32>
    %cst = arith.constant dense<0.000000e+00> : vector<8x512xf32>
    %8 = vector.multi_reduction <add>, %7, %cst [0] : vector<1x8x512xf32> to vector<8x512xf32>
    %9 = arith.addf %6, %8 : vector<8x512xf32>
    %c0_6 = arith.constant 0 : index
    %c0_7 = arith.constant 0 : index
    %10 = vector.load %arg4[%c0_6, %c0_7] : memref<8x512xf32, #tpu.memory_space<vmem>>, vector<8x512xf32>
    tpu.vector_store %arg4[%c0_6, %c0_7], %9 {strides = array<i32>} : memref<8x512xf32, #tpu.memory_space<vmem>>, vector<8x512xf32>,
    return
  }
  func.func @transform_0(%arg0: i32, %arg1: i32) -> (i32, i32) {
    %c1_i32 = arith.constant 1 : i32
    %0 = arith.muli %arg0, %c1_i32 : i32
    %1 = arith.addi %0, %arg1 : i32
    %c0_i32 = arith.constant 0 : i32
    %c0_i32_0 = arith.constant 0 : i32
    return %1, %c0_i32 : i32, i32
  }
  func.func @transform_1(%arg0: i32, %arg1: i32) -> (i32, i32) {
    %c1_i32 = arith.constant 1 : i32
    %0 = arith.muli %arg0, %c1_i32 : i32
    %1 = arith.addi %0, %arg1 : i32
    %c0_i32 = arith.constant 0 : i32
    %c0_i32_0 = arith.constant 0 : i32
    return %1, %c0_i32 : i32, i32
  }
  func.func @transform_2(%arg0: i32, %arg1: i32) -> (i32, i32) {
    %c0_i32 = arith.constant 0 : i32
    %c0_i32_0 = arith.constant 0 : i32
    return %arg0, %c0_i32 : i32, i32
  }
}

</mosaic_0001>

<llo_original>
// kernel: tpu_custom_call.1
$region0: #{tpu_custom_call.1}
  #allocation0 [shape = 'u32[]', space=smem, size = 0x4, offset = 0x4, fixed_abs, tag = 'smem constant byte address 0x4 - core index']
  #allocation1 [shape = 'u32[72,128]{1,0:T(1,128)}', space=vmem, size = 0x9000, scoped, tag = 'internal scratch']
  %s0 = inlined_call_operand.hbm [shape: f32[8,512], index: 0, kind: input, shape index: {}]
  %s1 = inlined_call_operand.hbm [shape: f32[8,512], index: 1, kind: input, shape index: {}]
  %s2 = inlined_call_operand.hbm [shape: f32[8,512], index: 2, kind: output, shape index: {}]
  %s3 = sld [smem:[#allocation0]]
  $region30: #{tpu_custom_call.1} parent=0
    _
  %s5 = ssub.s32 1, %s3
  %s6 = scalar_select 0, %s5, %s3
  $region1: #{tpu_custom_call.1} parent=0
    #allocation2 [shape = 'u8[16384]{0}', space=vmem, size = 0x4000, scoped, tag = 'input window, operand 0, single buffered']
    #allocation3 [shape = 's32[1]{0}', space=sflag, size = 0x4, scoped, tag = 'scoped memory for tpu_custom_call.1']
    #allocation4 [shape = 's32[1]{0}', space=sflag, size = 0x4, scoped, tag = 'scoped memory for tpu_custom_call.1']
    #allocation5 [shape = 'u8[16384]{0}', space=vmem, size = 0x4000, scoped, tag = 'input window, operand 1, single buffered']
    #allocation6 [shape = 's32[1]{0}', space=sflag, size = 0x4, scoped, tag = 'scoped memory for tpu_custom_call.1']
    #allocation7 [shape = 'u8[16384]{0}', space=vmem, size = 0x4000, scoped, tag = 'output window, operand 0, single buffered']
    %7 = vsyncpa [#allocation3], 0
    %8 = vsyncpa [#allocation6], 0
    %9 = vsyncpa [#allocation4], 0
    // Predicated region
    $region2: #{tpu_custom_call.1} parent=1 // pred_check
      _
    $region3: #{tpu_custom_call.1} parent=1 // pred_check_branch
      %11 = sbr.rel (0) target = $region5
    $region4: #{tpu_custom_call.1} parent=1 // pred_region
      %s12 = sadd.s32 0, 0
      %14 = vsyncadd [#allocation3], 0
      %s15 = smul.addr %s12, 4
      %s16 = smul.addr %s15, 8
      %s17 = scalar_lea.hbm %s0, %s16
      %s19 = sshll.u32 %s17, 4
      %s20 = int_to_ptr.hbm [resolvable:$true] %s19
      %s21 = sshll.u32 [#allocation2], 4
      %s22 = int_to_ptr.vmem [resolvable:$true] %s21
      %24 = dma.hbm_to_vmem [thread:$0]  %s20, 512, %s22, [#allocation3]
    $region5: #{tpu_custom_call.1} parent=1 // pred_fallthru
      _
    // Predicated region
    $region6: #{tpu_custom_call.1} parent=1 // pred_check
      _
    $region7: #{tpu_custom_call.1} parent=1 // pred_check_branch
      %26 = sbr.rel (0) target = $region9
    $region8: #{tpu_custom_call.1} parent=1 // pred_region
      %s27 = sadd.s32 0, 0
      %29 = vsyncadd [#allocation6], 0
      %s30 = smul.addr %s27, 4
      %s31 = smul.addr %s30, 8
      %s32 = scalar_lea.hbm %s1, %s31
      %s34 = sshll.u32 %s32, 4
      %s35 = int_to_ptr.hbm [resolvable:$true] %s34
      %s36 = sshll.u32 [#allocation5], 4
      %s37 = int_to_ptr.vmem [resolvable:$true] %s36
      %39 = dma.hbm_to_vmem [thread:$0]  %s35, 512, %s37, [#allocation6]
    $region9: #{tpu_custom_call.1} parent=1 // pred_fallthru
      _
    // Predicated region
    $region10: #{tpu_custom_call.1} parent=1 // pred_check
      _
    $region11: #{tpu_custom_call.1} parent=1 // pred_check_branch
      %41 = sbr.rel (0) target = $region13
    $region12: #{tpu_custom_call.1} parent=1 // pred_region
      %43 = dma.done [#allocation3], 512
    $region13: #{tpu_custom_call.1} parent=1 // pred_fallthru
      _
    // Predicated region
    $region14: #{tpu_custom_call.1} parent=1 // pred_check
      _
    $region15: #{tpu_custom_call.1} parent=1 // pred_check_branch
      %45 = sbr.rel (0) target = $region17
    $region16: #{tpu_custom_call.1} parent=1 // pred_region
      %47 = dma.done [#allocation6], 512
    $region17: #{tpu_custom_call.1} parent=1 // pred_fallthru
      _
    %s48 = sadd.s32 0, 0
    %s49 = sadd.s32 0, 0
    %p50 = scmp.eq.s32.totalorder 0, 0
    // Predicated region
    $region18: #{tpu_custom_call.1} parent=1 // pred_check
      %p51 = pneg %p50
    $region19: #{tpu_custom_call.1} parent=1 // pred_check_branch
      %53 = sbr.rel (%p51) target = $region21
    $region20: #{tpu_custom_call.1} parent=1 // pred_region
      %54 = vst [vmem:[#allocation7] sm:$0xff] 0.0
      %55 = vst [vmem:[#allocation7 + $0x8] sm:$0xff] 0.0
      %56 = vst [vmem:[#allocation7 + $0x10] sm:$0xff] 0.0
      %57 = vst [vmem:[#allocation7 + $0x18] sm:$0xff] 0.0
    $region21: #{tpu_custom_call.1} parent=1 // pred_fallthru
      _
    %v58 = vld [vmem:[#allocation2] sm:$0xff]
    %v59 = vld [vmem:[#allocation2 + $0x8] sm:$0xff]
    %v60 = vld [vmem:[#allocation2 + $0x10] sm:$0xff]
    %v61 = vld [vmem:[#allocation2 + $0x18] sm:$0xff]
    %v62 = vld [vmem:[#allocation5] sm:$0xff]
    %v63 = vld [vmem:[#allocation5 + $0x8] sm:$0xff]
    %v64 = vld [vmem:[#allocation5 + $0x10] sm:$0xff]
    %v65 = vld [vmem:[#allocation5 + $0x18] sm:$0xff]
    %v66 = vsub.f32 %v58, %v62
    %v67 = vsub.f32 %v59, %v63
    %v68 = vsub.f32 %v60, %v64
    %v69 = vsub.f32 %v61, %v65
    %v70 = vld [vmem:[#allocation7] sm:$0xff]
    %v71 = vld [vmem:[#allocation7 + $0x8] sm:$0xff]
    %v72 = vld [vmem:[#allocation7 + $0x10] sm:$0xff]
    %v73 = vld [vmem:[#allocation7 + $0x18] sm:$0xff]
    %v74 = vadd.f32 %v66, 0.0
    %v75 = vadd.f32 %v67, 0.0
    %v76 = vadd.f32 %v68, 0.0
    %v77 = vadd.f32 %v69, 0.0
    %v78 = vadd.f32 %v70, %v74
    %v79 = vadd.f32 %v71, %v75
    %v80 = vadd.f32 %v72, %v76
    %v81 = vadd.f32 %v73, %v77
    %82 = vst [vmem:[#allocation7] sm:$0xff] %v78
    %83 = vst [vmem:[#allocation7 + $0x8] sm:$0xff] %v79
    %84 = vst [vmem:[#allocation7 + $0x10] sm:$0xff] %v80
    %85 = vst [vmem:[#allocation7 + $0x18] sm:$0xff] %v81
    // Predicated region
    $region22: #{tpu_custom_call.1} parent=1 // pred_check
      _
    $region23: #{tpu_custom_call.1} parent=1 // pred_check_branch
      %87 = sbr.rel (0) target = $region25
    $region24: #{tpu_custom_call.1} parent=1 // pred_region
      %89 = vsyncadd [#allocation4], 0
      %s91 = sshll.u32 [#allocation7], 4
      %s92 = int_to_ptr.vmem [resolvable:$true] %s91
      %s93 = sshll.u32 %s2, 4
      %s94 = int_to_ptr.hbm [resolvable:$true] %s93
      %96 = dma.vmem_to_hbm [thread:$0]  %s92, 512, %s94, [#allocation4]
    $region25: #{tpu_custom_call.1} parent=1 // pred_fallthru
      _
    // Predicated region
    $region26: #{tpu_custom_call.1} parent=1 // pred_check
      _
    $region27: #{tpu_custom_call.1} parent=1 // pred_check_branch
      %98 = sbr.rel (0) target = $region29
    $region28: #{tpu_custom_call.1} parent=1 // pred_region
      %100 = dma.done [#allocation4], 512
    $region29: #{tpu_custom_call.1} parent=1 // pred_fallthru
      _
    %101 = vsyncpa [#allocation3], 1
    %102 = vsyncpa [#allocation6], 1
    %103 = vsyncpa [#allocation4], 1

</llo_original>
